<compile_context>
chip_gen: v7x
topology: tpu7x:2x2x1
jax: 0.10.0
libtpu: 0.0.40
codegen_flags: <defaults>
</compile_context>

<pallas_src>
import functools
import math

import numpy as np
import jax
import jax.numpy as jnp
from jax.experimental import pallas as pl
from jax.experimental.pallas import tpu as pltpu


# -----------------------------------------------------------------------------
# Small helpers
# -----------------------------------------------------------------------------
def _round_up(x, m):
    return ((x + m - 1) // m) * m


def _cdiv(a, b):
    return -(-a // b)


@functools.lru_cache(maxsize=1)
def _vmem_limit():
    """Generation-dependent VMEM ceiling (review item: chip-aware limits)."""
    cap = None
    try:
        info = pltpu.get_tpu_info()
        for name in ("vmem_capacity_bytes", "vmem_bytes", "vmem_size_bytes"):
            v = getattr(info, name, None)
            if v:
                cap = int(v)
                break
    except Exception:
        cap = None
    if cap is None:
        return 48 * 1024 * 1024          # safe everywhere (v7x has 64 MiB)
    if cap >= 100 * 1024 * 1024:         # v5e / v6e: 128 MiB physical
        return 96 * 1024 * 1024
    return 48 * 1024 * 1024              # v7x: 64 MiB physical


# -----------------------------------------------------------------------------
# Kernel 1: fused GEMM   out = act((x @ w) + shift [+ residual])
#   (BN scale is pre-folded into w; used for stride-2 convs, 1x1 convs, heads)
# -----------------------------------------------------------------------------
def _gemm_kernel(*refs, relu, has_residual, nk):
    if has_residual:
        x_ref, w_ref, b_ref, r_ref, o_ref = refs[:5]
        rest = refs[5:]
    else:
        x_ref, w_ref, b_ref, o_ref = refs[:4]
        r_ref = None
        rest = refs[4:]

    def _finish(acc):
        y = acc + b_ref[...]
        if has_residual:
            y = y + r_ref[...].astype(jnp.float32)
        if relu:
            y = jnp.maximum(y, 0.0)
        o_ref[...] = y.astype(o_ref.dtype)

    if nk == 1:
        _finish(jnp.dot(x_ref[...], w_ref[...],
                        preferred_element_type=jnp.float32))
    else:
        acc_ref = rest[0]

        @pl.when(pl.program_id(1) == 0)
        def _init():
            acc_ref[...] = jnp.zeros_like(acc_ref)

        acc_ref[...] += jnp.dot(x_ref[...], w_ref[...],
                                preferred_element_type=jnp.float32)

        @pl.when(pl.program_id(1) == nk - 1)
        def _done():
            _finish(acc_ref[...])


def _choose_tk(K, cap=4608):
    if K <= cap:
        return K, 0                       # full-K block, no padding
    for mult in range(cap // 128, 0, -1):
        t = mult * 128
        if K % t == 0:
            return t, 0
    kp = _round_up(K, 512)                # generic fallback (not hit here)
    return 512, kp - K


def _choose_tm(M, K):
    """K-aware M tile; guarantee >=2 M blocks when feasible (v7x 2nd core)."""
    if K <= 256:
        base = 2048
    elif K <= 1536:
        base = 1024
    elif K <= 4608:
        base = 512
    else:
        base = 256
    tm = base if M > base else _round_up(M, 8)
    if M >= 16 and _cdiv(M, tm) < 2:
        tm = _round_up(_cdiv(M, 2), 8)
    return max(tm, 8)


def fused_matmul(x, w, shift, *, relu, residual=None, out_dtype=jnp.bfloat16):
    """y = act((x @ w) + shift [+ residual]); bf16 MXU, f32 accumulation."""
    M, K = x.shape
    K2, N = w.shape
    assert K == K2

    xb = x if x.dtype == jnp.bfloat16 else x.astype(jnp.bfloat16)
    wb = w if w.dtype == jnp.bfloat16 else w.astype(jnp.bfloat16)
    rb = None
    if residual is not None:
        rb = residual if residual.dtype == jnp.bfloat16 else residual.astype(jnp.bfloat16)

    # Only the tiny-M head GEMMs (batch-size rows) get an 8-row pad; the big
    # conv GEMMs use ragged last M blocks (no HBM pad / output-crop copies).
    crop_m = 0
    if M < 8:
        crop_m = M
        xb = jnp.pad(xb, ((0, 8 - M), (0, 0)))
        if rb is not None:
            rb = jnp.pad(rb, ((0, 8 - M), (0, 0)))
        M = 8

    tk, kpad = _choose_tk(K)
    if kpad:  # K must stay zero-padded (garbage would corrupt the reduction)
        xb = jnp.pad(xb, ((0, 0), (0, kpad)))
        wb = jnp.pad(wb, ((0, kpad), (0, 0)))
    nk = (K + kpad) // tk
    tm = _choose_tm(M, K)
    gm = _cdiv(M, tm)

    bvec = shift.astype(jnp.float32).reshape(1, N)

    in_specs = [pl.BlockSpec((tm, tk), lambda i, k: (i, k)),
                pl.BlockSpec((tk, N), lambda i, k: (k, 0)),
                pl.BlockSpec((1, N), lambda i, k: (0, 0))]
    args = [xb, wb, bvec]
    if rb is not None:
        in_specs.append(pl.BlockSpec((tm, N), lambda i, k: (i, 0)))
        args.append(rb)
    out_spec = pl.BlockSpec((tm, N), lambda i, k: (i, 0))
    scratch = [] if nk == 1 else [pltpu.VMEM((tm, N), jnp.float32)]

    kernel = functools.partial(_gemm_kernel, relu=relu,
                               has_residual=rb is not None, nk=nk)
    out = pl.pallas_call(
        kernel,
        out_shape=jax.ShapeDtypeStruct((M, N), out_dtype),
        grid_spec=pltpu.PrefetchScalarGridSpec(
            num_scalar_prefetch=0,
            grid=(gm, nk),
            in_specs=in_specs,
            out_specs=out_spec,
            scratch_shapes=scratch),
        compiler_params=pltpu.CompilerParams(
            dimension_semantics=("parallel", "arbitrary"),
            vmem_limit_bytes=_vmem_limit()),
    )(*args)
    if crop_m:
        out = out[:crop_m]
    return out


# -----------------------------------------------------------------------------
# Kernel 2: fused direct conv (stride 1) — no im2col materialization.
#
# The padded NHWC image is flattened to (rows=hp*wp [+1 extra row], C).  For
# tap (di, dj) the kernel matmuls the contiguous row slab starting at element
# offset di*wp + dj against W[di, dj] and accumulates in f32.  Output rows are
# produced in "wide" (wp) coordinates; the (kw-1) wrap-around columns per row
# are garbage and are cropped outside the kernel.
# -----------------------------------------------------------------------------
def _direct_conv_kernel(*refs, kh, kw, wp, rows, relu, has_residual):
    if has_residual:
        x_ref, w_ref, b_ref, r_ref, o_ref = refs
    else:
        x_ref, w_ref, b_ref, o_ref = refs
        r_ref = None
    acc = None
    for di in range(kh):
        for dj in range(kw):
            xt = x_ref[0, pl.ds(di * wp + dj, rows), :]
            p = jnp.dot(xt, w_ref[di * kw + dj],
                        preferred_element_type=jnp.float32)
            acc = p if acc is None else acc + p
    y = acc + b_ref[...]
    if has_residual:
        y = y + r_ref[0].astype(jnp.float32)
    if relu:
        y = jnp.maximum(y, 0.0)
    o_ref[0] = y.astype(o_ref.dtype)


def _direct_fits(x_shape, kh, kw, cin, cout, pad, has_res):
    _, H, W, _ = x_shape
    hp, wp = H + 2 * pad, W + 2 * pad
    ho = hp - kh + 1
    rows = ho * wp
    tco = cout // (2 if cout >= 256 else 1)
    x_b = (hp + 1) * wp * cin * 2
    o_b = rows * tco * 2
    w_b = kh * kw * cin * tco * 2
    r_b = o_b if has_res else 0
    need = 2 * (x_b + o_b + w_b + r_b) + 4 * rows * tco * 4
    return need <= int(0.6 * _vmem_limit())


def _direct_conv(x, prep, kh, kw, *, pad, relu, residual):
    N, H, W, cin = x.shape
    cout = prep["w"].shape[1]
    hp, wp = H + 2 * pad, W + 2 * pad
    ho, wo = hp - kh + 1, wp - kw + 1
    rows = ho * wp

    xb = x if x.dtype == jnp.bfloat16 else x.astype(jnp.bfloat16)
    # Conv zero padding plus ONE extra bottom row: the widened per-tap row
    # windows may run (kw-1) elements past hp*wp in the flattened buffer.
    xb = jnp.pad(xb, ((0, 0), (pad, pad + 1), (pad, pad), (0, 0)))
    xf = xb.reshape(N, (hp + 1) * wp, cin)

    w3 = prep["w"].reshape(kh * kw, cin, cout)   # free metadata reshape
    shift = prep["shift"]                        # (1, cout) f32, pre-folded

    n_co = 2 if cout >= 256 else 1               # >=2 parallel blocks for v7x
    tco = cout // n_co

    in_specs = [
        pl.BlockSpec((1, (hp + 1) * wp, cin), lambda n, j: (n, 0, 0)),
        pl.BlockSpec((kh * kw, cin, tco), lambda n, j: (0, 0, j)),
        pl.BlockSpec((1, tco), lambda n, j: (0, j)),
    ]
    args = [xf, w3, shift]
    has_res = residual is not None
    if has_res:
        rb = residual if residual.dtype == jnp.bfloat16 else residual.astype(jnp.bfloat16)
        rb = jnp.pad(rb, ((0, 0), (0, 0), (0, wp - wo), (0, 0)))
        args.append(rb.reshape(N, rows, cout))
        in_specs.append(pl.BlockSpec((1, rows, tco), lambda n, j: (n, 0, j)))
    out_spec = pl.BlockSpec((1, rows, tco), lambda n, j: (n, 0, j))

    kernel = functools.partial(_direct_conv_kernel, kh=kh, kw=kw, wp=wp,
                               rows=rows, relu=relu, has_residual=has_res)
    out = pl.pallas_call(
        kernel,
        out_shape=jax.ShapeDtypeStruct((N, rows, cout), jnp.bfloat16),
        grid_spec=pltpu.PrefetchScalarGridSpec(
            num_scalar_prefetch=0,
            grid=(N, n_co),
            in_specs=in_specs,
            out_specs=out_spec,
            scratch_shapes=[]),
        compiler_params=pltpu.CompilerParams(
            dimension_semantics=("parallel", "parallel"),
            vmem_limit_bytes=_vmem_limit()),
    )(*args)
    # Drop the (kw-1) wrap-around garbage columns of each widened output row.
    return out.reshape(N, ho, wp, cout)[:, :, :wo, :]


# -----------------------------------------------------------------------------
# Conv / pooling building blocks
# -----------------------------------------------------------------------------
def _im2col(x, kh, kw, stride, pad):
    """Only used for stride-2 convs and 1x1 convs (cheap reshape)."""
    N, H, W, C = x.shape
    if kh == 1 and kw == 1:
        if stride > 1:
            x = x[:, ::stride, ::stride, :]
        Ho, Wo = x.shape[1], x.shape[2]
        return x.reshape(N * Ho * Wo, C), N, Ho, Wo
    if pad > 0:
        x = jnp.pad(x, ((0, 0), (pad, pad), (pad, pad), (0, 0)))
    Hp, Wp = H + 2 * pad, W + 2 * pad
    Ho = (Hp - kh) // stride + 1
    Wo = (Wp - kw) // stride + 1
    pieces = []
    for i in range(kh):
        for j in range(kw):
            pieces.append(x[:, i:i + stride * (Ho - 1) + 1:stride,
                            j:j + stride * (Wo - 1) + 1:stride, :])
    cols = jnp.stack(pieces, axis=3)                 # (N, Ho, Wo, kh*kw, C)
    return cols.reshape(N * Ho * Wo, kh * kw * C), N, Ho, Wo


def conv_bn_act(x, prep, *, stride=1, pad=0, relu=True, residual=None):
    """Conv2d + folded BN affine + optional fused residual/ReLU (NHWC)."""
    K, cout = prep["w"].shape
    cin = x.shape[-1]
    kk = K // cin
    kh = kw = int(round(math.sqrt(kk)))
    if stride == 1 and kh > 1 and _direct_fits(x.shape, kh, kw, cin, cout,
                                               pad, residual is not None):
        return _direct_conv(x, prep, kh, kw, pad=pad, relu=relu,
                            residual=residual)
    # Fallback: im2col + GEMM (stride-2 convs, 1x1 convs, oversized images).
    cols, N, Ho, Wo = _im2col(x, kh, kw, stride, pad)
    res2d = None if residual is None else residual.reshape(-1, cout)
    y = fused_matmul(cols, prep["w"], prep["shift"], relu=relu,
                     residual=res2d, out_dtype=jnp.bfloat16)
    return y.reshape(N, Ho, Wo, cout)


def _linear(prep, x, *, relu=False, out_dtype=jnp.float32):
    return fused_matmul(x, prep["w"], prep["shift"], relu=relu,
                        out_dtype=out_dtype)


def maxpool_3x3_s2(x):
    """nn.MaxPool2d(3, stride=2, padding=1) on NHWC (XLA elementwise fusion)."""
    N, H, W, C = x.shape
    xp = jnp.pad(x, ((0, 0), (1, 1), (1, 1), (0, 0)), constant_values=-jnp.inf)
    Ho = (H - 1) // 2 + 1
    Wo = (W - 1) // 2 + 1
    out = None
    for i in range(3):
        for j in range(3):
            v = xp[:, i:i + 2 * (Ho - 1) + 1:2, j:j + 2 * (Wo - 1) + 1:2, :]
            out = v if out is None else jnp.maximum(out, v)
    return out


def global_avg_pool(x):
    """AdaptiveAvgPool2d((1,1)) + flatten (tiny; left to XLA)."""
    return jnp.mean(x.astype(jnp.float32), axis=(1, 2))


# -----------------------------------------------------------------------------
# Resampling helpers (tiny dense linear maps; plain-JAX glue)
# -----------------------------------------------------------------------------
def _adaptive_pool_matrix(in_size, out_size):
    A = np.zeros((out_size, in_size), np.float32)
    for i in range(out_size):
        s = (i * in_size) // out_size
        e = ((i + 1) * in_size + out_size - 1) // out_size
        A[i, s:e] = 1.0 / (e - s)
    return jnp.asarray(A)


def adaptive_avg_pool(x, out_hw):
    Ah = _adaptive_pool_matrix(x.shape[1], out_hw)
    Aw = _adaptive_pool_matrix(x.shape[2], out_hw)
    y = jnp.einsum("oh,nhwc->nowc", Ah, x)
    return jnp.einsum("pw,nowc->nopc", Aw, y)


def _bilinear_matrix(in_size, out_size):
    # The reference model uses F.interpolate(..., align_corners=True).
    A = np.zeros((out_size, in_size), np.float32)
    if out_size == 1:
        pos = np.zeros((1,), np.float64)
    else:
        pos = np.arange(out_size, dtype=np.float64) * (in_size - 1) / (out_size - 1)
    lo = np.clip(np.floor(pos).astype(np.int64), 0, in_size - 1)
    hi = np.minimum(lo + 1, in_size - 1)
    frac = pos - lo
    for o in range(out_size):
        A[o, lo[o]] += 1.0 - frac[o]
        A[o, hi[o]] += frac[o]
    return jnp.asarray(A)


def bilinear_resize(x, out_size):
    Ah = _bilinear_matrix(x.shape[1], out_size)
    Aw = _bilinear_matrix(x.shape[2], out_size)
    y = jnp.einsum("oh,nhwc->nowc", Ah, x)
    return jnp.einsum("pw,nowc->nopc", Aw, y)


# -----------------------------------------------------------------------------
# Raw parameter initialization (deterministic, synthetic; mirrors PyTorch init)
# -----------------------------------------------------------------------------
PLANES = (64, 128, 256, 512)
STRIDES = (1, 2, 2, 2)
EXPANSION = 1  # BasicBlock


def _kaiming_conv(key, shape):
    cout, cin, kh, kw = shape
    std = math.sqrt(2.0 / (cin * kh * kw))
    return std * jax.random.normal(key, shape, jnp.float32)


def _linear_init(key, fan_in, fan_out):
    k1, k2 = jax.random.split(key)
    bound = 1.0 / math.sqrt(fan_in)
    w = jax.random.uniform(k1, (fan_in, fan_out), jnp.float32, -bound, bound)
    b = jax.random.uniform(k2, (fan_out,), jnp.float32, -bound, bound)
    return w, b


def _make_bn(c):
    return dict(gamma=jnp.ones((c,), jnp.float32),
                beta=jnp.zeros((c,), jnp.float32),
                mean=jnp.zeros((c,), jnp.float32),
                var=jnp.ones((c,), jnp.float32))


def _init_basic_block(key, inplanes, planes, stride):
    k1, k2, k3 = jax.random.split(key, 3)
    p = dict(conv1_w=_kaiming_conv(k1, (planes, inplanes, 3, 3)),
             bn1=_make_bn(planes),
             conv2_w=_kaiming_conv(k2, (planes, planes, 3, 3)),
             bn2=_make_bn(planes))
    if stride != 1 or inplanes != planes * EXPANSION:
        p["down_w"] = _kaiming_conv(k3, (planes * EXPANSION, inplanes, 1, 1))
        p["down_bn"] = _make_bn(planes * EXPANSION)
    return p


def _init_pyramid(key, cin, mid=128, cout=32):
    k1, k2 = jax.random.split(key)
    return dict(conv1_w=_kaiming_conv(k1, (mid, cin, 1, 1)),
                conv1_b=jnp.zeros((mid,), jnp.float32),
                bn=_make_bn(mid),
                conv2_w=_kaiming_conv(k2, (cout, mid, 1, 1)),
                conv2_b=jnp.zeros((cout,), jnp.float32))


def _init_upsample(key, cin=64, cout=32):
    return dict(conv_w=_kaiming_conv(key, (cout, cin, 3, 3)),
                conv_b=jnp.zeros((cout,), jnp.float32),
                bn=_make_bn(cout))


def init_params(key, layers=(1, 1, 1, 1), num_classes=1000):
    keys = iter(jax.random.split(key, 256))
    p = {"conv1": _kaiming_conv(next(keys), (64, 3, 7, 7)), "bn1": _make_bn(64)}
    inplanes = 64
    for li, (planes, nblocks, stride0) in enumerate(zip(PLANES, layers, STRIDES)):
        blocks = []
        for bi in range(nblocks):
            stride = stride0 if bi == 0 else 1
            blocks.append(_init_basic_block(next(keys), inplanes, planes, stride))
            inplanes = planes * EXPANSION
        p["layer%d" % (li + 1)] = blocks
    feat = 512 * EXPANSION
    p["fc_patch"] = _linear_init(next(keys), feat, num_classes)
    p["fc_slide_cls"] = _linear_init(next(keys), feat * 5 * 5, 2)
    p["fc_slide_reg"] = [_linear_init(next(keys), feat * 5 * 5, 512),
                         _linear_init(next(keys), 512, 128),
                         _linear_init(next(keys), 128, 1)]
    p["pyramid_10"] = _init_pyramid(next(keys), 512 * EXPANSION)
    p["pyramid_19"] = _init_pyramid(next(keys), 256 * EXPANSION)
    p["pyramid_38"] = _init_pyramid(next(keys), 128 * EXPANSION)
    p["upsample_conv1"] = _init_upsample(next(keys))
    p["upsample_conv2"] = _init_upsample(next(keys))
    return p


# -----------------------------------------------------------------------------
# One-time inference prep: fold BN scale into bf16 weights, keep only shift
# -----------------------------------------------------------------------------
def _fold_bn(bn, conv_bias=None, eps=1e-5):
    scale = bn["gamma"] / jnp.sqrt(bn["var"] + eps)
    shift = bn["beta"] - bn["mean"] * scale
    if conv_bias is not None:
        shift = shift + conv_bias * scale
    return scale, shift


def _prep_conv(w_oihw, scale, shift):
    cout, cin, kh, kw = w_oihw.shape
    wmat = jnp.transpose(w_oihw, (2, 3, 1, 0)).reshape(kh * kw * cin, cout)
    wmat = wmat * scale[None, :]          # fold BN scale into the weights
    return dict(w=wmat.astype(jnp.bfloat16),
                shift=shift.astype(jnp.float32).reshape(1, cout))


def _prep_linear(w, b):
    return dict(w=w.astype(jnp.bfloat16),
                shift=b.astype(jnp.float32).reshape(1, w.shape[1]))


def prepare_params(raw):
    prep = {}
    s, b = _fold_bn(raw["bn1"])
    prep["conv1"] = _prep_conv(raw["conv1"], s, b)
    for li in range(4):
        blocks = []
        for bp in raw["layer%d" % (li + 1)]:
            blk = {}
            s1, b1 = _fold_bn(bp["bn1"])
            blk["conv1"] = _prep_conv(bp["conv1_w"], s1, b1)
            s2, b2 = _fold_bn(bp["bn2"])
            blk["conv2"] = _prep_conv(bp["conv2_w"], s2, b2)
            if "down_w" in bp:
                sd, bd = _fold_bn(bp["down_bn"])
                blk["down"] = _prep_conv(bp["down_w"], sd, bd)
            blocks.append(blk)
        prep["layer%d" % (li + 1)] = blocks
    prep["fc_patch"] = _prep_linear(*raw["fc_patch"])
    prep["fc_slide_cls"] = _prep_linear(*raw["fc_slide_cls"])
    prep["fc_slide_reg"] = [_prep_linear(*wb) for wb in raw["fc_slide_reg"]]
    for name in ("pyramid_10", "pyramid_19", "pyramid_38"):
        pr = raw[name]
        s1, b1 = _fold_bn(pr["bn"], conv_bias=pr["conv1_b"])
        c1 = _prep_conv(pr["conv1_w"], s1, b1)
        ones = jnp.ones((pr["conv2_w"].shape[0],), jnp.float32)
        c2 = _prep_conv(pr["conv2_w"], ones, pr["conv2_b"])
        prep[name] = dict(conv1=c1, conv2=c2)
    for name in ("upsample_conv1", "upsample_conv2"):
        up = raw[name]
        s, b = _fold_bn(up["bn"], conv_bias=up["conv_b"])
        prep[name] = _prep_conv(up["conv_w"], s, b)
    return prep


# -----------------------------------------------------------------------------
# Forward pass
# -----------------------------------------------------------------------------
def _basic_block(blk, x, stride):
    out = conv_bn_act(x, blk["conv1"], stride=stride, pad=1, relu=True)
    if "down" in blk:
        identity = conv_bn_act(x, blk["down"], stride=stride, pad=0, relu=False)
    else:
        identity = x
    # conv2 + BN + residual add + ReLU fused in one Pallas epilogue
    return conv_bn_act(out, blk["conv2"], stride=1, pad=1, relu=True,
                       residual=identity)


def _backbone(prep, x_nchw):
    x = jnp.transpose(x_nchw, (0, 2, 3, 1)).astype(jnp.bfloat16)  # NCHW -> NHWC
    x = conv_bn_act(x, prep["conv1"], stride=2, pad=3, relu=True)
    x = maxpool_3x3_s2(x)
    feats = []
    for li in range(4):
        for bi, blk in enumerate(prep["layer%d" % (li + 1)]):
            stride = STRIDES[li] if bi == 0 else 1
            x = _basic_block(blk, x, stride)
        feats.append(x)
    return feats  # x1, x2, x3, x4 (NHWC, bf16)


def forward_patch(prep, x_nchw):
    _, _, _, x4 = _backbone(prep, x_nchw)
    pooled = global_avg_pool(x4)                       # avgpool_patch + flatten
    return _linear(prep["fc_patch"], pooled)           # (N, num_classes) f32


def _pyramid(p, x):
    y = conv_bn_act(x, p["conv1"], stride=1, pad=0, relu=True)
    return conv_bn_act(y, p["conv2"], stride=1, pad=0, relu=False)


def forward_slide(prep, x_nchw):
    # NOTE: the hard-coded interpolate sizes (19, 38) of the reference module
    # require ~299-304 px inputs so that x3 is 19x19 and x2 is 38x38.
    _, x2, x3, x4 = _backbone(prep, x_nchw)
    N = x4.shape[0]

    pooled = adaptive_avg_pool(x4.astype(jnp.float32), 5)        # (N,5,5,512)
    flat = jnp.transpose(pooled, (0, 3, 1, 2)).reshape(N, -1)    # torch (C,H,W)

    out_cls = _linear(prep["fc_slide_cls"], flat)                # (N, 2)

    l1, l2, l3 = prep["fc_slide_reg"]
    h = _linear(l1, flat, relu=True)        # TODO(synk): Dropout == identity
    h = _linear(l2, h, relu=True)
    out_reg = _linear(l3, h)                                     # (N, 1)

    out_x4 = _pyramid(prep["pyramid_10"], x4)
    out_x3 = _pyramid(prep["pyramid_19"], x3)
    out_x2 = _pyramid(prep["pyramid_38"], x2)

    seg = bilinear_resize(out_x4.astype(jnp.float32), 19).astype(jnp.bfloat16)
    seg = jnp.concatenate([seg, out_x3], axis=-1)
    seg = conv_bn_act(seg, prep["upsample_conv1"], stride=1, pad=1, relu=True)
    seg = bilinear_resize(seg.astype(jnp.float32), 38).astype(jnp.bfloat16)
    seg = jnp.concatenate([seg, out_x2], axis=-1)
    seg = conv_bn_act(seg, prep["upsample_conv2"], stride=1, pad=1, relu=True)

    return out_cls, out_reg, jnp.transpose(seg, (0, 3, 1, 2)).astype(jnp.float32)


class MILResNetPallas:
    """JAX/Pallas port of MILResNet (BasicBlock backbone, folded inference BN)."""

    def __init__(self, layers=(1, 1, 1, 1), num_classes=1000, key=None):
        if key is None:
            key = jax.random.PRNGKey(42)
        raw = init_params(key, layers=layers, num_classes=num_classes)
        self.params = prepare_params(raw)   # one-time fold/transpose/bf16 cast
        self.mode = None
        self._patch = jax.jit(forward_patch)
        self._slide = jax.jit(forward_slide)

    def setmode(self, mode):
        self.mode = mode

    def __call__(self, x):
        if self.mode == "patch":
            return self._patch(self.params, x)
        elif self.mode == "slide":
            return self._slide(self.params, x)
        raise Exception("Something wrong in setmode.")


# -----------------------------------------------------------------------------
if __name__ == "__main__":
    root = jax.random.PRNGKey(0)
    pkey, xkey, k1, k2, k3, k4, k5 = jax.random.split(root, 7)

    # --- correctness probe: fused GEMM kernel vs XLA reference ---------------
    a = jax.random.normal(k1, (96, 200), jnp.float32)
    b = jax.random.normal(k2, (200, 48), jnp.float32)
    sh = jax.random.normal(k3, (1, 48), jnp.float32)
    got = jax.jit(functools.partial(fused_matmul, relu=True,
                                    out_dtype=jnp.float32))(
        a, b.astype(jnp.bfloat16), sh)
    af = a.astype(jnp.bfloat16).astype(jnp.float32)
    bf = b.astype(jnp.bfloat16).astype(jnp.float32)
    ref = jnp.maximum(af @ bf + sh, 0.0)
    err = float(jnp.max(jnp.abs(got - ref)))
    scl = float(jnp.max(jnp.abs(ref))) + 1e-6
    assert err <= 0.05 * scl + 0.05, ("gemm mismatch", err, scl)

    # --- correctness probe: fused direct-conv kernel vs XLA conv -------------
    xc = jax.random.normal(k4, (2, 12, 12, 32), jnp.float32)
    wc = jax.random.normal(k5, (48, 32, 3, 3), jnp.float32) * 0.1
    cprep = _prep_conv(wc, jnp.ones((48,), jnp.float32),
                       jnp.zeros((48,), jnp.float32))
    gotc = jax.jit(lambda xx: conv_bn_act(xx, cprep, stride=1, pad=1,
                                          relu=False))(xc)
    refc = jax.lax.conv_general_dilated(
        xc.astype(jnp.bfloat16).astype(jnp.float32),
        wc.astype(jnp.bfloat16).astype(jnp.float32),
        window_strides=(1, 1), padding=((1, 1), (1, 1)),
        dimension_numbers=("NHWC", "OIHW", "NHWC"))
    errc = float(jnp.max(jnp.abs(gotc.astype(jnp.float32) - refc)))
    sclc = float(jnp.max(jnp.abs(refc))) + 1e-6
    assert errc <= 0.05 * sclc + 0.05, ("conv mismatch", errc, sclc)

    # --- full model, 'patch' mode --------------------------------------------
    model = MILResNetPallas(layers=(1, 1, 1, 1), num_classes=10, key=pkey)
    model.setmode("patch")

    x = jax.random.normal(xkey, (2, 3, 64, 64), jnp.float32)
    logits = model(x)
    jax.block_until_ready(logits)

    assert logits.shape == (2, 10), logits.shape
    assert bool(jnp.all(jnp.isfinite(logits)))

    # 'slide' mode (out_cls, out_reg, out_seg) is implemented above; it needs a
    # ~299-304 px input so that x3=19 and x2=38 match the hard-coded
    # F.interpolate sizes of the reference model, so it is not run at the small
    # demo resolution.

    print("KERNEL_OK")
</pallas_src>

<mosaic_0001>
module attributes {stable_mosaic.version = 11 : i64} {
  func.func @_gemm_kernel(%arg0: i32, %arg1: i32, %arg2: memref<48x200xbf16, #tpu.memory_space<vmem>>, %arg3: memref<200x48xbf16, #tpu.memory_space<vmem>>, %arg4: memref<1x48xf32, #tpu.memory_space<vmem>>, %arg5: memref<48x48xf32, #tpu.memory_space<vmem>>) attributes {dimension_semantics = [#tpu.dimension_semantics<parallel>, #tpu.dimension_semantics<arbitrary>], iteration_bounds = array<i64: 2, 1>, scalar_prefetch = 0 : i64, scratch_operands = 0 : i64, tpu.core_type = #tpu.core_type<tc>, window_params = [{transform_indices = @transform_0, window_bounds = array<i64: 48, 200>}, {transform_indices = @transform_1, window_bounds = array<i64: 200, 48>}, {pipeline_mode = #tpu.pipeline_mode<synchronous>, transform_indices = @transform_2, window_bounds = array<i64: 1, 48>}, {transform_indices = @transform_3, window_bounds = array<i64: 48, 48>}]} {
    %c0 = arith.constant 0 : index
    %c0_0 = arith.constant 0 : index
    %0 = vector.load %arg2[%c0, %c0_0] : memref<48x200xbf16, #tpu.memory_space<vmem>>, vector<48x200xbf16>
    %c0_1 = arith.constant 0 : index
    %c0_2 = arith.constant 0 : index
    %1 = vector.load %arg3[%c0_1, %c0_2] : memref<200x48xbf16, #tpu.memory_space<vmem>>, vector<200x48xbf16>
    %cst = arith.constant dense<0.000000e+00> : vector<48x48xf32>
    %2 = tpu.matmul %0, %1, %cst {dimension_numbers = #tpu.dot_dimension_numbers<[1], [0], [0], [1], [0, 0, 1, 1], [], []>} : vector<48x200xbf16>, vector<200x48xbf16>, vector<48x48xf32> -> vector<48x48xf32>
    %c0_3 = arith.constant 0 : index
    %c0_4 = arith.constant 0 : index
    %3 = vector.load %arg4[%c0_3, %c0_4] : memref<1x48xf32, #tpu.memory_space<vmem>>, vector<1x48xf32>
    %4 = vector.broadcast %3 : vector<1x48xf32> to vector<48x48xf32>
    %5 = arith.addf %2, %4 : vector<48x48xf32>
    %cst_5 = arith.constant 0.000000e+00 : f32
    %6 = vector.broadcast %cst_5 : f32 to vector<48x48xf32>
    %7 = arith.maximumf %5, %6 : vector<48x48xf32>
    %c0_6 = arith.constant 0 : index
    %c0_7 = arith.constant 0 : index
    %8 = vector.load %arg5[%c0_6, %c0_7] : memref<48x48xf32, #tpu.memory_space<vmem>>, vector<48x48xf32>
    tpu.vector_store %arg5[%c0_6, %c0_7], %7 {strides = array<i32>} : memref<48x48xf32, #tpu.memory_space<vmem>>, vector<48x48xf32>,
    return
  }
  func.func @transform_0(%arg0: i32, %arg1: i32) -> (i32, i32) {
    %c0_i32 = arith.constant 0 : i32
    return %arg0, %arg1 : i32, i32
  }
  func.func @transform_1(%arg0: i32, %arg1: i32) -> (i32, i32) {
    %c0_i32 = arith.constant 0 : i32
    %c0_i32_0 = arith.constant 0 : i32
    return %arg1, %c0_i32 : i32, i32
  }
  func.func @transform_2(%arg0: i32, %arg1: i32) -> (i32, i32) {
    %c0_i32 = arith.constant 0 : i32
    %c0_i32_0 = arith.constant 0 : i32
    %c0_i32_1 = arith.constant 0 : i32
    return %c0_i32, %c0_i32_0 : i32, i32
  }
  func.func @transform_3(%arg0: i32, %arg1: i32) -> (i32, i32) {
    %c0_i32 = arith.constant 0 : i32
    %c0_i32_0 = arith.constant 0 : i32
    return %arg0, %c0_i32 : i32, i32
  }
}

</mosaic_0001>

<llo_original>
// kernel: fused_matmul.1
$region0: #{fused_matmul.1}
  #allocation0 [shape = 'u32[]', space=smem, size = 0x4, offset = 0x4, fixed_abs, tag = 'smem constant byte address 0x4 - core index']
  #allocation1 [shape = 'u32[144,128]{1,0:T(1,128)}', space=vmem, size = 0x12000, scoped, tag = 'internal scratch']
  %s0 = inlined_call_operand.vmem [shape: bf16[96,200], index: 0, kind: input, shape index: {}]
  %s1 = inlined_call_operand.vmem [shape: bf16[200,48], index: 1, kind: input, shape index: {}]
  %s2 = inlined_call_operand.vmem [shape: f32[1,48], index: 2, kind: input, shape index: {}]
  %s3 = inlined_call_operand.vmem [shape: f32[96,48], index: 3, kind: output, shape index: {}]
  %s4 = sld [smem:[#allocation0]]
  $region45: #{fused_matmul.1} parent=0
    _
  %s6 = ssub.s32 1, %s4
  %s7 = scalar_select 0, %s6, %s4
  loop: start=0, step=1, limit=4
  $region2: #{fused_matmul.1} parent=0 // loop_pre_header
    _
  $region3: #{fused_matmul.1} parent=0 // loop_header
    %s9 = sphi 0, %s13
    %p10 = scmp.ge.s32.totalorder %s9, 4
    %s16 = sphi 0, %s28
    %s17 = sphi 0, %s24
    %s18 = sphi 0, %s16
    %s19 = sphi 0, %s17
    %s20 = sphi 0, %s18
    %s21 = sphi 0, %s19
    %s33 = sphi 0, %s35
    %s36 = sphi 0, %s33
    %s37 = sphi 0, %s36
    %s53 = sphi 0, %s37
    %s59 = sphi 0, %s61
    %s62 = sphi 0, %s59
    %s63 = sphi 0, %s62
    %s79 = sphi 0, %s63
    %s83 = sphi 0, %s83
    %s85 = sphi 0, %s83
    %s86 = sphi 0, %s85
    %s100 = sphi 0, %s86
    %s106 = sphi 0, %s108
    %s109 = sphi 0, %s106
    %s110 = sphi 0, %s109
    %s126 = sphi 0, %s110
  $region4: #{fused_matmul.1} parent=0 // loop_header_branch
    %12 = sbr.rel (%p10) target = $region8
  $region5: #{fused_matmul.1} parent=0 // loop_body
    %s14 = ssub.s32 %s9, 1
    %s15 = ssub.s32 %s9, 2
    %s22 = sadd.s32 1, %s17
    %p23 = scmp.ge.s32.totalorder %s22, 1
    %s24 = scalar_select %p23, 0, %s22
    %s25 = sadd.s32 1, %s16
    %s26 = scalar_select %p23, %s25, %s16
    %p27 = scmp.ge.s32.totalorder %s26, 2
    %s28 = scalar_select %p27, 0, %s26
    %s29 = ssub.s32 %s16, %s28
    %s30 = ssub.s32 %s17, %s24
    %s31 = sor.u32 %s29, %s30
    %p32 = scmp.eq.s32.totalorder %s31, 0
    %s34 = sadd.s32 %s33, 1
    %s35 = scalar_select %p32, %s33, %s34
    %p38 = pneg %p32
    %p39 = scmp.eq.s32.totalorder %s9, 1
    %p40 = por %p38, %p39
    %p41 = scmp.ne.s32.totalorder %s33, %s36
    %p42 = scmp.eq.s32.totalorder %s9, 0
    %p43 = por %p41, %p42
    %p44 = scmp.ne.s32.totalorder %s33, %s36
    %p45 = scmp.eq.s32.totalorder %s14, 1
    %p46 = por %p44, %p45
    %p47 = scmp.ne.s32.totalorder %s36, %s37
    %p48 = scmp.eq.s32.totalorder %s14, 0
    %p49 = por %p47, %p48
    %p50 = scmp.ne.s32.totalorder %s36, %s37
    %p51 = scmp.eq.s32.totalorder %s15, 1
    %p52 = por %p50, %p51
    %p54 = scmp.ne.s32.totalorder %s37, %s53
    %p55 = scmp.eq.s32.totalorder %s15, 0
    %p56 = por %p54, %p55
    %s57 = ssub.s32 %s17, %s24
    %p58 = scmp.eq.s32.totalorder %s57, 0
    %s60 = sadd.s32 %s59, 1
    %s61 = scalar_select %p58, %s59, %s60
    %p64 = pneg %p58
    %p65 = scmp.eq.s32.totalorder %s9, 1
    %p66 = por %p64, %p65
    %p67 = scmp.ne.s32.totalorder %s59, %s62
    %p68 = scmp.eq.s32.totalorder %s9, 0
    %p69 = por %p67, %p68
    %p70 = scmp.ne.s32.totalorder %s59, %s62
    %p71 = scmp.eq.s32.totalorder %s14, 1
    %p72 = por %p70, %p71
    %p73 = scmp.ne.s32.totalorder %s62, %s63
    %p74 = scmp.eq.s32.totalorder %s14, 0
    %p75 = por %p73, %p74
    %p76 = scmp.ne.s32.totalorder %s62, %s63
    %p77 = scmp.eq.s32.totalorder %s15, 1
    %p78 = por %p76, %p77
    %p80 = scmp.ne.s32.totalorder %s63, %s79
    %p81 = scmp.eq.s32.totalorder %s15, 0
    %p82 = por %p80, %p81
    %s84 = sadd.s32 %s83, 1
    %p87 = scmp.eq.s32.totalorder %s9, 1
    %p88 = scmp.ne.s32.totalorder %s83, %s85
    %p89 = scmp.eq.s32.totalorder %s9, 0
    %p90 = por %p88, %p89
    %p91 = scmp.ne.s32.totalorder %s83, %s85
    %p92 = scmp.eq.s32.totalorder %s14, 1
    %p93 = por %p91, %p92
    %p94 = scmp.ne.s32.totalorder %s85, %s86
    %p95 = scmp.eq.s32.totalorder %s14, 0
    %p96 = por %p94, %p95
    %p97 = scmp.ne.s32.totalorder %s85, %s86
    %p98 = scmp.eq.s32.totalorder %s15, 1
    %p99 = por %p97, %p98
    %p101 = scmp.ne.s32.totalorder %s86, %s100
    %p102 = scmp.eq.s32.totalorder %s15, 0
    %p103 = por %p101, %p102
    %s104 = ssub.s32 %s16, %s28
    %p105 = scmp.eq.s32.totalorder %s104, 0
    %s107 = sadd.s32 %s106, 1
    %s108 = scalar_select %p105, %s106, %s107
    %p111 = pneg %p105
    %p112 = scmp.eq.s32.totalorder %s9, 1
    %p113 = por %p111, %p112
    %p114 = scmp.ne.s32.totalorder %s106, %s109
    %p115 = scmp.eq.s32.totalorder %s9, 0
    %p116 = por %p114, %p115
    %p117 = scmp.ne.s32.totalorder %s106, %s109
    %p118 = scmp.eq.s32.totalorder %s14, 1
    %p119 = por %p117, %p118
    %p120 = scmp.ne.s32.totalorder %s109, %s110
    %p121 = scmp.eq.s32.totalorder %s14, 0
    %p122 = por %p120, %p121
    %p123 = scmp.ne.s32.totalorder %s109, %s110
    %p124 = scmp.eq.s32.totalorder %s15, 1
    %p125 = por %p123, %p124
    %p127 = scmp.ne.s32.totalorder %s110, %s126
    %p128 = scmp.eq.s32.totalorder %s15, 0
    %p129 = por %p127, %p128
    %p130 = scmp.le.s32.totalorder 1, %s9
    %p131 = scmp.lt.s32.totalorder %s9, 3
    %p132 = pnand %p130, %p131
    %p133 = pneg %p132
    // Predicated region
    $region9: #{fused_matmul.1} parent=5 // pred_check
      _
    $region10: #{fused_matmul.1} parent=5 // pred_check_branch
      %135 = sbr.rel (%p132) target = $region12
    $region11: #{fused_matmul.1} parent=5 // pred_region
      %s136 = ssub.s32 %s9, 1
      // Predicated region
      $region13: #{fused_matmul.1} parent=11 // pred_check
        %p137 = pneg %p75
      $region14: #{fused_matmul.1} parent=11 // pred_check_branch
        %139 = sbr.rel (%p137) target = $region16
      $region15: #{fused_matmul.1} parent=11 // pred_region
        %s140 = smul.u32 25, %s19
        %p141 = scmp.lt.s32.totalorder %s140, 24
        %s142 = scalar_select %p141, %s140, 24
        %s143 = smul.addr %s142, 4
        %s144 = scalar_lea.vmem %s1, %s143
        %s145 = smul.u32 25, %s19
      $region16: #{fused_matmul.1} parent=11 // pred_fallthru
        _
      // Predicated region
      $region17: #{fused_matmul.1} parent=11 // pred_check
        %p146 = pneg %p96
      $region18: #{fused_matmul.1} parent=11 // pred_check_branch
        %148 = sbr.rel (%p146) target = $region20
      $region19: #{fused_matmul.1} parent=11 // pred_region
        _
      $region20: #{fused_matmul.1} parent=11 // pred_fallthru
        _
    $region12: #{fused_matmul.1} parent=5 // pred_fallthru
      _
    %p149 = scmp.lt.s32.totalorder %s9, 2
    // Predicated region
    $region21: #{fused_matmul.1} parent=5 // pred_check
      %p150 = pneg %p149
    $region22: #{fused_matmul.1} parent=5 // pred_check_branch
      %152 = sbr.rel (%p150) target = $region24
    $region23: #{fused_matmul.1} parent=5 // pred_region
      // Predicated region
      $region25: #{fused_matmul.1} parent=23 // pred_check
        %p153 = pneg %p43
      $region26: #{fused_matmul.1} parent=23 // pred_check_branch
        %155 = sbr.rel (%p153) target = $region28
      $region27: #{fused_matmul.1} parent=23 // pred_region
        %s156 = smul.u32 6, %s16
        %s157 = smul.u32 2, %s17
        %p158 = scmp.lt.s32.totalorder %s156, 11
        %s159 = scalar_select %p158, %s156, 11
        %p160 = scmp.lt.s32.totalorder %s157, 1
        %s161 = scalar_select %p160, %s157, 1
        %s162 = smul.addr %s159, 2
        %s163 = sadd.s32 %s161, %s162
        %s164 = smul.addr %s163, 4
        %s165 = scalar_lea.vmem %s0, %s164
        %s166 = smul.u32 6, %s16
        %s167 = smul.u32 2, %s17
      $region28: #{fused_matmul.1} parent=23 // pred_fallthru
        _
    $region24: #{fused_matmul.1} parent=5 // pred_fallthru
      _
    %p168 = scmp.le.s32.totalorder 1, %s9
    %p169 = scmp.lt.s32.totalorder %s9, 3
    %p170 = pnand %p168, %p169
    %p171 = pneg %p170
    // Predicated region
    $region29: #{fused_matmul.1} parent=5 // pred_check
      _
    $region30: #{fused_matmul.1} parent=5 // pred_check_branch
      %173 = sbr.rel (%p170) target = $region32
    $region31: #{fused_matmul.1} parent=5 // pred_region
      %s174 = ssub.s32 %s9, 1
      %s175 = smul.u32 6, %s18
      %s176 = smul.u32 2, %s19
      %p177 = scmp.lt.s32.totalorder %s175, 11
      %s178 = scalar_select %p177, %s175, 11
      %p179 = scmp.lt.s32.totalorder %s176, 1
      %s180 = scalar_select %p179, %s176, 1
      %s181 = smul.addr %s178, 2
      %s182 = sadd.s32 %s180, %s181
      %s183 = smul.addr %s182, 4
      %s184 = scalar_lea.vmem %s0, %s183
      %p185 = pneg %p49
      %p186 = pneg %p46
      %s187 = smul.u32 25, %s19
      %p188 = scmp.lt.s32.totalorder %s187, 24
      %s189 = scalar_select %p188, %s187, 24
      %s190 = smul.addr %s189, 4
      %s191 = scalar_lea.vmem %s1, %s190
      %p192 = pneg %p75
      %p193 = pneg %p72
      %p194 = pneg %p96
      %p195 = pneg %p93
      %p196 = pneg %p122
      %p197 = pneg %p119
      %s198 = smul.u32 6, %s18
      %p199 = scmp.lt.s32.totalorder %s198, 11
      %s200 = scalar_select %p199, %s198, 11
      %s201 = smul.addr %s200, 8
      %s202 = scalar_lea.vmem %s3, %s201
      %s203 = smul.u32 6, %s18
      %s204 = smul.u32 2, %s19
      %p205 = scmp.lt.s32.totalorder %s203, 11
      %s206 = scalar_select %p205, %s203, 11
      %p207 = scmp.lt.s32.totalorder %s204, 1
      %s208 = scalar_select %p207, %s204, 1
      %s209 = smul.addr %s206, 2
      %s210 = sadd.s32 %s208, %s209
      %s211 = smul.addr %s210, 4
      %s212 = scalar_lea.vmem %s0, %s211
      %s213 = smul.u32 6, %s18
      %s214 = smul.u32 2, %s19
      %s215 = smul.u32 25, %s19
      %p216 = scmp.lt.s32.totalorder %s215, 24
      %s217 = scalar_select %p216, %s215, 24
      %s218 = smul.addr %s217, 4
      %s219 = scalar_lea.vmem %s1, %s218
      %s220 = smul.u32 25, %s19
      %s221 = smul.u32 6, %s18
      %p222 = scmp.lt.s32.totalorder %s221, 11
      %s223 = scalar_select %p222, %s221, 11
      %s224 = smul.addr %s223, 8
      %s225 = scalar_lea.vmem %s3, %s224
      %s226 = smul.u32 6, %s18
      %v228 = vld [vmem:[%s212] sm:$0xff]
      %v229 = vld [vmem:[%s212 + $0x8] sm:$0xff]
      %v230 = vld [vmem:[%s212 + $0x10] sm:$0xff]
      %v231 = vld [vmem:[%s212 + $0x18] sm:$0xff]
      %v232 = vld [vmem:[%s212 + $0x20] sm:$0xff]
      %v233 = vld [vmem:[%s212 + $0x28] sm:$0xff]
      %v234 = vld [vmem:[%s219] sm:$0xf]
      %v235 = vld [vmem:[%s219 + $0x4] sm:$0xf]
      %v236 = vld [vmem:[%s219 + $0x8] sm:$0xf]
      %v237 = vld [vmem:[%s219 + $0xc] sm:$0xf]
      %v238 = vld [vmem:[%s219 + $0x10] sm:$0xf]
      %v239 = vld [vmem:[%s219 + $0x14] sm:$0xf]
      %v240 = vld [vmem:[%s219 + $0x18] sm:$0xf]
      %v241 = vld [vmem:[%s219 + $0x1c] sm:$0xf]
      %v242 = vld [vmem:[%s219 + $0x20] sm:$0xf]
      %v243 = vld [vmem:[%s219 + $0x24] sm:$0xf]
      %v244 = vld [vmem:[%s219 + $0x28] sm:$0xf]
      %v245 = vld [vmem:[%s219 + $0x2c] sm:$0xf]
      %v246 = vld [vmem:[%s219 + $0x30] sm:$0xf]
      %v247 = vld [vmem:[%s219 + $0x34] sm:$0xf]
      %v248 = vld [vmem:[%s219 + $0x38] sm:$0xf]
      %v249 = vld [vmem:[%s219 + $0x3c] sm:$0xf]
      %v250 = vld [vmem:[%s219 + $0x40] sm:$0xf]
      %v251 = vld [vmem:[%s219 + $0x44] sm:$0xf]
      %v252 = vld [vmem:[%s219 + $0x48] sm:$0xf]
      %v253 = vld [vmem:[%s219 + $0x4c] sm:$0xf]
      %v254 = vld [vmem:[%s219 + $0x50] sm:$0xf]
      %v255 = vld [vmem:[%s219 + $0x54] sm:$0xf]
      %v256 = vld [vmem:[%s219 + $0x58] sm:$0xf]
      %v257 = vld [vmem:[%s219 + $0x5c] sm:$0xf]
      %v258 = vld [vmem:[%s219 + $0x60] sm:$0xf]
      %v259 = vld [vmem:[%s2] sm:$0x1]
      %v261 = vlaneseq
      %v262 = vshrl.u32 %v261, 7
      %v263 = vsub.s32 0, %v262
      %v264 = vrot.slane %v259, %v263
      %v272 = vunpack.c.l.b16 %v228
      %v273 = vunpack.c.h.b16 %v228
      %v274 = vunpack.c.l.b16 %v229
      %v275 = vunpack.c.h.b16 %v229
      %v276 = vunpack.c.l.b16 %v230
      %v277 = vunpack.c.h.b16 %v230
      %v278 = vunpack.c.l.b16 %v231
      %v279 = vunpack.c.h.b16 %v231
      %v280 = vunpack.c.l.b16 %v232
      %v281 = vunpack.c.h.b16 %v232
      %v282 = vunpack.c.l.b16 %v233
      %v283 = vunpack.c.h.b16 %v233
      %v284 = vpack.c.b16 %v274, %v272
      %v285 = vpack.c.b16 %v275, %v273
      %v286 = vpack.c.b16 %v278, %v276
      %v287 = vpack.c.b16 %v279, %v277
      %v288 = vpack.c.b16 %v282, %v280
      %v289 = vpack.c.b16 %v283, %v281
      %v318 = vunpack.c.l.b16 %v234
      %v319 = vunpack.c.l.b16 %v235
      %v320 = vunpack.c.l.b16 %v236
      %v321 = vunpack.c.l.b16 %v237
      %v322 = vunpack.c.l.b16 %v238
      %v323 = vunpack.c.l.b16 %v239
      %v324 = vunpack.c.l.b16 %v240
      %v325 = vunpack.c.l.b16 %v241
      %v326 = vunpack.c.l.b16 %v242
      %v327 = vunpack.c.l.b16 %v243
      %v328 = vunpack.c.l.b16 %v244
      %v329 = vunpack.c.l.b16 %v245
      %v330 = vunpack.c.l.b16 %v246
      %v331 = vunpack.c.l.b16 %v247
      %v332 = vunpack.c.l.b16 %v248
      %v333 = vunpack.c.l.b16 %v249
      %v334 = vunpack.c.l.b16 %v250
      %v335 = vunpack.c.l.b16 %v251
      %v336 = vunpack.c.l.b16 %v252
      %v337 = vunpack.c.l.b16 %v253
      %v338 = vunpack.c.l.b16 %v254
      %v339 = vunpack.c.l.b16 %v255
      %v340 = vunpack.c.l.b16 %v256
      %v341 = vunpack.c.l.b16 %v257
      %v342 = vunpack.c.l.b16 %v258
      %v343 = vpack.c.b16 %v319, %v318
      %v344 = vpack.c.b16 %v321, %v320
      %v345 = vpack.c.b16 %v323, %v322
      %v346 = vpack.c.b16 %v325, %v324
      %v347 = vpack.c.b16 %v327, %v326
      %v348 = vpack.c.b16 %v329, %v328
      %v349 = vpack.c.b16 %v331, %v330
      %v350 = vpack.c.b16 %v333, %v332
      %v351 = vpack.c.b16 %v335, %v334
      %v352 = vpack.c.b16 %v337, %v336
      %v353 = vpack.c.b16 %v339, %v338
      %v354 = vpack.c.b16 %v341, %v340
      %v355 = vpack.c.b16 %v342, %v342
      %vm368 = vcmask 588800
      %v370 = vsel %vm368, %v285, 0
      %v373 = vsel %vm368, %v287, 0
      %v376 = vsel %vm368, %v289, 0
      %vm378 = vcmask 1043456
      %v380 = vsel %vm378, %v355, 0
      %382 = vmatprep.subr.bf16.mxu0 0
      %383 = vmatpush1.bf16.msra.mxu0 %v343
      %384 = vmatprep.subr.bf16.mxu0 0
      %385 = vmatpush1.bf16.msra.mxu0 %v344
      %386 = vmatprep.subr.bf16.mxu0 0
      %387 = vmatpush1.bf16.msra.mxu0 %v345
      %388 = vmatprep.subr.bf16.mxu0 0
      %389 = vmatpush1.bf16.msra.mxu0 %v346
      %390 = vmatprep.subr.bf16.mxu0 0
      %391 = vmatpush1.bf16.msra.mxu0 %v347
      %392 = vmatprep.subr.bf16.mxu0 0
      %393 = vmatpush1.bf16.msra.mxu0 %v348
      %394 = vmatprep.subr.bf16.mxu0 0
      %395 = vmatpush1.bf16.msra.mxu0 %v349
      %396 = vmatprep.subr.bf16.mxu0 0
      %397 = vmatpush1.bf16.msra.mxu0 %v350
      %398 = vmatprep.subr.bf16.mxu0 0
      %399 = vmatpush1.bf16.msra.mxu0 %v351
      %400 = vmatprep.subr.bf16.mxu0 0
      %401 = vmatpush1.bf16.msra.mxu0 %v352
      %402 = vmatprep.subr.bf16.mxu0 0
      %403 = vmatpush1.bf16.msra.mxu0 %v353
      %404 = vmatprep.subr.bf16.mxu0 0
      %405 = vmatpush1.bf16.msra.mxu0 %v354
      %406 = vmatprep.subr.bf16.mxu0 0
      %407 = vmatpush1.bf16.msra.mxu0 %v380
      %408 = vmatprep.subr.bf16.mxu0 0
      %409 = vmatpush1.bf16.msra.mxu0 0
      %410 = vmatprep.subr.bf16.mxu0 0
      %411 = vmatpush1.bf16.msra.mxu0 0
      %412 = vmatprep.subr.bf16.mxu0 0
      %413 = vmatpush1.bf16.msra.mxu0 0
      %414 = vmatprep.mubr.bf16.mxu0 %v370
      %415 = vmatmul.mubr.bf16.gmra.mrb[0].mxu0 %v284
      %v416 = vpop.f32.mrb[0].mxu0
      %v417 = vadd.f32 %v264, %v416
      %v418 = vpop.f32.mrb[0].mxu0
      %v419 = vpop.f32.mrb[0].mxu0
      %v420 = vadd.f32 %v264, %v419
      %v421 = vpop.f32.mrb[0].mxu0
      %422 = vmatprep.mubr.bf16.mxu0 %v373
      %423 = vmatmul.mubr.bf16.gmra.mrb[0].mxu0 %v286
      %v424 = vpop.f32.mrb[0].mxu0
      %v425 = vadd.f32 %v264, %v424
      %v426 = vpop.f32.mrb[0].mxu0
      %v427 = vpop.f32.mrb[0].mxu0
      %v428 = vadd.f32 %v264, %v427
      %v429 = vpop.f32.mrb[0].mxu0
      %430 = vmatprep.mubr.bf16.mxu0 %v376
      %431 = vmatmul.mubr.bf16.gmra.mrb[0].mxu0 %v288
      %v432 = vpop.f32.mrb[0].mxu0
      %v433 = vadd.f32 %v264, %v432
      %v434 = vpop.f32.mrb[0].mxu0
      %v435 = vpop.f32.mrb[0].mxu0
      %v436 = vadd.f32 %v264, %v435
      %v437 = vpop.f32.mrb[0].mxu0
      %438 = vdwg.mxu0
      %v439 = vmax.f32 %v417, 0.0
      %v440 = vmax.f32 %v420, 0.0
      %v441 = vmax.f32 %v425, 0.0
      %v442 = vmax.f32 %v428, 0.0
      %v443 = vmax.f32 %v433, 0.0
      %v444 = vmax.f32 %v436, 0.0
      %vm445 = vcmask 392192
      %446 = vst.msk [vmem:[%s225] sm:$0xff] %vm445, %v439
      %447 = vst.msk [vmem:[%s225 + $0x8] sm:$0xff] %vm445, %v440
      %448 = vst.msk [vmem:[%s225 + $0x10] sm:$0xff] %vm445, %v441
      %449 = vst.msk [vmem:[%s225 + $0x18] sm:$0xff] %vm445, %v442
      %450 = vst.msk [vmem:[%s225 + $0x20] sm:$0xff] %vm445, %v443
      %451 = vst.msk [vmem:[%s225 + $0x28] sm:$0xff] %vm445, %v444
      %s452 = smul.u32 6, %s18
      %p453 = scmp.lt.s32.totalorder %s452, 11
      %s454 = scalar_select %p453, %s452, 11
      %s455 = smul.addr %s454, 8
      %s456 = scalar_lea.vmem %s3, %s455
      // Predicated region
      $region33: #{fused_matmul.1} parent=31 // pred_check
        %p457 = pneg %p119
      $region34: #{fused_matmul.1} parent=31 // pred_check_branch
        %459 = sbr.rel (%p457) target = $region36
      $region35: #{fused_matmul.1} parent=31 // pred_region
        %s460 = smul.u32 6, %s18
      $region36: #{fused_matmul.1} parent=31 // pred_fallthru
        _
    $region32: #{fused_matmul.1} parent=5 // pred_fallthru
      _
    %p461 = scmp.le.s32.totalorder 2, %s9
    // Predicated region
    $region37: #{fused_matmul.1} parent=5 // pred_check
      %p462 = pneg %p461
    $region38: #{fused_matmul.1} parent=5 // pred_check_branch
      %464 = sbr.rel (%p462) target = $region40
    $region39: #{fused_matmul.1} parent=5 // pred_region
      %s465 = ssub.s32 %s9, 2
      // Predicated region
      $region41: #{fused_matmul.1} parent=39 // pred_check
        %p466 = pneg %p125
      $region42: #{fused_matmul.1} parent=39 // pred_check_branch
        %468 = sbr.rel (%p466) target = $region44
      $region43: #{fused_matmul.1} parent=39 // pred_region
        %s469 = smul.u32 6, %s20
        %p470 = scmp.lt.s32.totalorder %s469, 11
        %s471 = scalar_select %p470, %s469, 11
        %s472 = smul.addr %s471, 8
        %s473 = scalar_lea.vmem %s3, %s472
      $region44: #{fused_matmul.1} parent=39 // pred_fallthru
        _
    $region40: #{fused_matmul.1} parent=5 // pred_fallthru
      _
  $region6: #{fused_matmul.1} parent=0 // loop_footer
    %s13 = sadd.s32 1, %s9
  $region7: #{fused_matmul.1} parent=0 // loop_footer_branch
    %8 = sbr.rel target = $region3
  $region8: #{fused_matmul.1} parent=0 // loop_exit
    _

</llo_original>
